<compile_context>
chip_gen: v5e
topology: v5e:2x2
jax: 0.10.0
libtpu: 0.0.40
codegen_flags: <defaults>
</compile_context>

<pallas_src>
import jax
import jax.numpy as jnp
from jax.experimental import pallas as pl
from jax.experimental.pallas import tpu as pltpu

HIDDEN_NEURONS = 100
OUT_NEURONS = 2
HID_PAD = 128    # lane-aligned hidden width
OUT_PAD = 128    # lane-aligned output width (real logits live in lanes 0..1)
NEG_BIG = -1e30  # padded-logit bias; exp underflows to exactly 0


def _round_up(x, m):
    return (x + m - 1) // m * m


# --------------------------------------------------------------------------
# Kernel
# --------------------------------------------------------------------------
def _mlp_softmax_kernel(x_ref, w1_ref, b1_ref, w2_ref, b2_ref, o_ref):
    # x tile arrives f32; cast to bf16 in-kernel (saves a wrapper-side HBM
    # read+write pass over x). W1 is bf16; MXU accumulates in f32.
    xb = x_ref[...].astype(jnp.bfloat16)
    h = jnp.dot(xb, w1_ref[...], preferred_element_type=jnp.float32) + b1_ref[...]
    h = jnp.maximum(h, 0.0)  # ReLU (padded hidden lanes stay exactly 0)

    # Second matmul: bf16 x bf16 -> f32 accumulate. Padded output lanes get a
    # -1e30 bias so the full 128-lane softmax is exact for the 2 real classes.
    logits = jnp.dot(h.astype(jnp.bfloat16), w2_ref[...],
                     preferred_element_type=jnp.float32) + b2_ref[...]

    # Numerically stable softmax over dim=1 (padded lanes -> exactly 0).
    m = jnp.max(logits, axis=1, keepdims=True)
    e = jnp.exp(logits - m)
    denom = jnp.sum(e, axis=1, keepdims=True)
    o_ref[...] = (e * pl.reciprocal(denom, approx=True)).astype(o_ref.dtype)


# --------------------------------------------------------------------------
# Tiling / VMEM sizing
# --------------------------------------------------------------------------
def _choose_tb(B, D):
    """Batch-tile size: multiple of 16, VMEM-budgeted, >=2 grid steps if possible."""
    # Keep pipeline buffers within ~28 MiB so the kernel fits every generation
    # (v5e 16 MiB scoped default is raised via vmem_limit_bytes; v7x has 64 MiB
    # physical). Budget conservatively assumes 2 buffers for the weights.
    budget = 28 << 20
    resident = 2 * (D * HID_PAD * 2 + HID_PAD * OUT_PAD * 2
                    + (HID_PAD + OUT_PAD) * 4)
    avail = max(budget - resident, 2 << 20)
    # The f32 x tile (double-buffered) dominates: 8 * TB * D bytes.
    tb = min(2048, max(16, avail // (8 * D)))
    # Ensure >= 2 grid steps when the batch allows it (v7x: 2 TensorCores on
    # the 'parallel' batch axis); round to the bf16 sublane multiple of 16.
    tb = min(tb, max(16, _round_up(-(-B // 2), 16)))
    return max(16, (tb // 16) * 16)


def _vmem_limit_bytes(TB, D):
    x_bufs = 2 * TB * D * 4                      # x tile, f32, double-buffered
    w_bufs = 2 * (D * HID_PAD * 2                # W1 bf16 (assume 2 buffers)
                  + HID_PAD * OUT_PAD * 2        # W2 bf16
                  + (HID_PAD + OUT_PAD) * 4)     # biases f32
    o_bufs = 2 * TB * OUT_PAD * 2                # out tile, bf16, double-buffered
    headroom = 4 << 20                           # h/logits intermediates + scratch
    return int(min(x_bufs + w_bufs + o_bufs + headroom, 64 << 20))


def _resident_spec(shape, nbytes):
    """BlockSpec for a grid-invariant operand (constant index_map => DMA'd once).

    For large operands, also request a single pipeline buffer (halves its VMEM
    footprint) when this JAX version supports BlockSpec(pipeline_mode=...).
    """
    index_map = lambda i: (0,) * len(shape)
    if nbytes >= (2 << 20) and hasattr(pl, "Buffered"):
        try:
            return pl.BlockSpec(shape, index_map, pipeline_mode=pl.Buffered(1))
        except TypeError:
            pass
    return pl.BlockSpec(shape, index_map)


# --------------------------------------------------------------------------
# One-time parameter prep (hoisted out of the per-call path)
# --------------------------------------------------------------------------
def prepare_params(w1, b1, w2, b2):
    """Pad/cast weights once: hidden 100->128, output 2->128; bf16 matmul weights."""
    D = w1.shape[0]
    assert w1.shape == (D, HIDDEN_NEURONS)
    assert w2.shape == (HIDDEN_NEURONS, OUT_NEURONS)
    w1p = jnp.zeros((D, HID_PAD), jnp.bfloat16)
    w1p = w1p.at[:, :HIDDEN_NEURONS].set(w1.astype(jnp.bfloat16))
    b1p = jnp.zeros((1, HID_PAD), jnp.float32)
    b1p = b1p.at[:, :HIDDEN_NEURONS].set(b1.reshape(1, HIDDEN_NEURONS).astype(jnp.float32))
    w2p = jnp.zeros((HID_PAD, OUT_PAD), jnp.bfloat16)
    w2p = w2p.at[:HIDDEN_NEURONS, :OUT_NEURONS].set(w2.astype(jnp.bfloat16))
    b2p = jnp.full((1, OUT_PAD), NEG_BIG, jnp.float32)
    b2p = b2p.at[:, :OUT_NEURONS].set(b2.reshape(1, OUT_NEURONS).astype(jnp.float32))
    return w1p, b1p, w2p, b2p


# --------------------------------------------------------------------------
# Forward (jitted steady-state path)
# --------------------------------------------------------------------------
@jax.jit
def net_forward(x_nchw, w1p, b1p, w2p, b2p):
    """x_nchw: (B, C, H, W) float32; padded params from prepare_params.
    Returns softmax probs (B, 2) float32."""
    B = x_nchw.shape[0]
    x2d = x_nchw.reshape(B, -1).astype(jnp.float32)  # flatten(x, 1); f32 into kernel
    D = x2d.shape[1]
    assert w1p.shape == (D, HID_PAD)

    TB = _choose_tb(B, D)
    grid = (pl.cdiv(B, TB),)  # partial edge block; no jnp.pad copy of x

    # Advisory cost estimate for XLA scheduling around the custom call.
    flops = 2 * B * D * HID_PAD + 2 * B * HID_PAD * OUT_PAD
    bytes_accessed = (B * D * 4                      # x (f32, read once)
                      + D * HID_PAD * 2              # W1 bf16
                      + HID_PAD * OUT_PAD * 2        # W2 bf16
                      + (HID_PAD + OUT_PAD) * 4      # biases
                      + B * OUT_PAD * 2)             # output bf16
    cost = pl.CostEstimate(flops=flops, transcendentals=B * OUT_PAD,
                           bytes_accessed=bytes_accessed)

    out = pl.pallas_call(
        _mlp_softmax_kernel,
        out_shape=jax.ShapeDtypeStruct((B, OUT_PAD), jnp.bfloat16),
        grid=grid,
        in_specs=[
            pl.BlockSpec((TB, D), lambda i: (i, 0)),                 # x tile (f32)
            _resident_spec((D, HID_PAD), D * HID_PAD * 2),           # W1 (resident)
            _resident_spec((1, HID_PAD), HID_PAD * 4),               # b1 (resident)
            _resident_spec((HID_PAD, OUT_PAD), HID_PAD * OUT_PAD * 2),  # W2
            _resident_spec((1, OUT_PAD), OUT_PAD * 4),               # b2 (resident)
        ],
        out_specs=pl.BlockSpec((TB, OUT_PAD), lambda i: (i, 0)),
        compiler_params=pltpu.CompilerParams(
            dimension_semantics=("parallel",),
            vmem_limit_bytes=_vmem_limit_bytes(TB, D)),
        cost_estimate=cost,
    )(x2d, w1p, b1p, w2p, b2p)

    # Drop padded output lanes (and any partial-edge garbage rows), cast tiny
    # (B, 2) slice back to f32.
    return out[:B, :OUT_NEURONS].astype(jnp.float32)


# --------------------------------------------------------------------------
# Reference / init / test harness
# --------------------------------------------------------------------------
def init_params(key, in_neurons):
    """Deterministic init mimicking torch.nn.Linear default U(-1/sqrt(fan_in), +)."""
    k1, k2, k3, k4 = jax.random.split(key, 4)
    bound1 = 1.0 / jnp.sqrt(jnp.float32(in_neurons))
    bound2 = 1.0 / jnp.sqrt(jnp.float32(HIDDEN_NEURONS))
    w1 = jax.random.uniform(k1, (in_neurons, HIDDEN_NEURONS), jnp.float32,
                            -bound1, bound1)
    b1 = jax.random.uniform(k2, (HIDDEN_NEURONS,), jnp.float32, -bound1, bound1)
    w2 = jax.random.uniform(k3, (HIDDEN_NEURONS, OUT_NEURONS), jnp.float32,
                            -bound2, bound2)
    b2 = jax.random.uniform(k4, (OUT_NEURONS,), jnp.float32, -bound2, bound2)
    return w1, b1, w2, b2


def _reference_forward(x_nchw, w1, b1, w2, b2):
    """Pure-JAX f32 reference of the PyTorch forward."""
    x2d = x_nchw.reshape(x_nchw.shape[0], -1).astype(jnp.float32)
    h = jnp.maximum(x2d @ w1 + b1, 0.0)
    logits = h @ w2 + b2
    return jax.nn.softmax(logits, axis=1)


if __name__ == "__main__":
    key = jax.random.PRNGKey(0)
    kx, kp = jax.random.split(key)

    # Small NCHW input consistent with "flatten then Linear" usage.
    B, C, H, W = 2, 4, 16, 16
    x = jax.random.normal(kx, (B, C, H, W), jnp.float32)
    in_neurons = C * H * W

    w1, b1, w2, b2 = init_params(kp, in_neurons)
    params = prepare_params(w1, b1, w2, b2)   # one-time, hoisted out of call path

    probs = net_forward(x, *params)
    probs = jax.block_until_ready(probs)

    assert probs.shape == (B, OUT_NEURONS)

    # Rows of the 2-class softmax sum to 1 (approx-reciprocal + bf16 tolerance).
    row_sums = jnp.sum(probs, axis=1)
    assert bool(jnp.all(jnp.abs(row_sums - 1.0) < 1e-2)), row_sums

    # Match the f32 reference within bf16-matmul tolerance (accepted tradeoff).
    ref = _reference_forward(x, w1, b1, w2, b2)
    max_err = float(jnp.max(jnp.abs(probs - ref)))
    assert max_err < 2e-2, max_err

    print("KERNEL_OK")
</pallas_src>

<mosaic_0001>
module attributes {stable_mosaic.version = 11 : i64} {
  func.func @_mlp_softmax_kernel(%arg0: i32, %arg1: memref<16x1024xf32, #tpu.memory_space<vmem>>, %arg2: memref<1024x128xbf16, #tpu.memory_space<vmem>>, %arg3: memref<1x128xf32, #tpu.memory_space<vmem>>, %arg4: memref<128x128xbf16, #tpu.memory_space<vmem>>, %arg5: memref<1x128xf32, #tpu.memory_space<vmem>>, %arg6: memref<16x128xbf16, #tpu.memory_space<vmem>>) attributes {dimension_semantics = [#tpu.dimension_semantics<parallel>], iteration_bounds = array<i64: 1>, scalar_prefetch = 0 : i64, scratch_operands = 0 : i64, tpu.core_type = #tpu.core_type<tc>, window_params = [{transform_indices = @transform_0, window_bounds = array<i64: 16, 1024>}, {pipeline_mode = #tpu.pipeline_mode<synchronous>, transform_indices = @transform_1, window_bounds = array<i64: 1024, 128>}, {pipeline_mode = #tpu.pipeline_mode<synchronous>, transform_indices = @transform_2, window_bounds = array<i64: 1, 128>}, {pipeline_mode = #tpu.pipeline_mode<synchronous>, transform_indices = @transform_3, window_bounds = array<i64: 128, 128>}, {pipeline_mode = #tpu.pipeline_mode<synchronous>, transform_indices = @transform_4, window_bounds = array<i64: 1, 128>}, {transform_indices = @transform_5, window_bounds = array<i64: 16, 128>}]} {
    %c0 = arith.constant 0 : index
    %c0_0 = arith.constant 0 : index
    %0 = vector.load %arg1[%c0, %c0_0] : memref<16x1024xf32, #tpu.memory_space<vmem>>, vector<16x1024xf32>
    %1 = arith.truncf %0 : vector<16x1024xf32> to vector<16x1024xbf16>
    %c0_1 = arith.constant 0 : index
    %c0_2 = arith.constant 0 : index
    %2 = vector.load %arg2[%c0_1, %c0_2] : memref<1024x128xbf16, #tpu.memory_space<vmem>>, vector<1024x128xbf16>
    %cst = arith.constant dense<0.000000e+00> : vector<16x128xf32>
    %3 = tpu.matmul %1, %2, %cst {dimension_numbers = #tpu.dot_dimension_numbers<[1], [0], [0], [1], [0, 0, 1, 1], [], []>} : vector<16x1024xbf16>, vector<1024x128xbf16>, vector<16x128xf32> -> vector<16x128xf32>
    %c0_3 = arith.constant 0 : index
    %c0_4 = arith.constant 0 : index
    %4 = vector.load %arg3[%c0_3, %c0_4] : memref<1x128xf32, #tpu.memory_space<vmem>>, vector<1x128xf32>
    %5 = vector.broadcast %4 : vector<1x128xf32> to vector<16x128xf32>
    %6 = arith.addf %3, %5 : vector<16x128xf32>
    %cst_5 = arith.constant 0.000000e+00 : f32
    %7 = vector.broadcast %cst_5 : f32 to vector<16x128xf32>
    %8 = arith.maximumf %6, %7 : vector<16x128xf32>
    %9 = arith.truncf %8 : vector<16x128xf32> to vector<16x128xbf16>
    %c0_6 = arith.constant 0 : index
    %c0_7 = arith.constant 0 : index
    %10 = vector.load %arg4[%c0_6, %c0_7] : memref<128x128xbf16, #tpu.memory_space<vmem>>, vector<128x128xbf16>
    %cst_8 = arith.constant dense<0.000000e+00> : vector<16x128xf32>
    %11 = tpu.matmul %9, %10, %cst_8 {dimension_numbers = #tpu.dot_dimension_numbers<[1], [0], [0], [1], [0, 0, 1, 1], [], []>} : vector<16x128xbf16>, vector<128x128xbf16>, vector<16x128xf32> -> vector<16x128xf32>
    %c0_9 = arith.constant 0 : index
    %c0_10 = arith.constant 0 : index
    %12 = vector.load %arg5[%c0_9, %c0_10] : memref<1x128xf32, #tpu.memory_space<vmem>>, vector<1x128xf32>
    %13 = vector.broadcast %12 : vector<1x128xf32> to vector<16x128xf32>
    %14 = arith.addf %11, %13 : vector<16x128xf32>
    %cst_11 = arith.constant dense<0xFF800000> : vector<16xf32>
    %15 = vector.multi_reduction <maximumf>, %14, %cst_11 [1] : vector<16x128xf32> to vector<16xf32>
    %16 = vector.shape_cast %15 : vector<16xf32> to vector<16x1xf32>
    %17 = vector.broadcast %16 : vector<16x1xf32> to vector<16x128xf32>
    %18 = arith.subf %14, %17 : vector<16x128xf32>
    %19 = math.exp %18 : vector<16x128xf32>
    %cst_12 = arith.constant dense<0.000000e+00> : vector<16xf32>
    %20 = vector.multi_reduction <add>, %19, %cst_12 [1] : vector<16x128xf32> to vector<16xf32>
    %21 = vector.shape_cast %20 : vector<16xf32> to vector<16x1xf32>
    %22 = tpu.reciprocal %21 {approx = true} : vector<16x1xf32> -> vector<16x1xf32>
    %23 = vector.broadcast %22 : vector<16x1xf32> to vector<16x128xf32>
    %24 = arith.mulf %19, %23 : vector<16x128xf32>
    %25 = arith.truncf %24 : vector<16x128xf32> to vector<16x128xbf16>
    %c0_13 = arith.constant 0 : index
    %c0_14 = arith.constant 0 : index
    %26 = vector.load %arg6[%c0_13, %c0_14] : memref<16x128xbf16, #tpu.memory_space<vmem>>, vector<16x128xbf16>
    tpu.vector_store %arg6[%c0_13, %c0_14], %25 {strides = array<i32>} : memref<16x128xbf16, #tpu.memory_space<vmem>>, vector<16x128xbf16>,
    return
  }
  func.func @transform_0(%arg0: i32) -> (i32, i32) {
    %c0_i32 = arith.constant 0 : i32
    %c0_i32_0 = arith.constant 0 : i32
    return %arg0, %c0_i32 : i32, i32
  }
  func.func @transform_1(%arg0: i32) -> (i32, i32) {
    %c0_i32 = arith.constant 0 : i32
    %c0_i32_0 = arith.constant 0 : i32
    %c0_i32_1 = arith.constant 0 : i32
    return %c0_i32, %c0_i32_0 : i32, i32
  }
  func.func @transform_2(%arg0: i32) -> (i32, i32) {
    %c0_i32 = arith.constant 0 : i32
    %c0_i32_0 = arith.constant 0 : i32
    %c0_i32_1 = arith.constant 0 : i32
    return %c0_i32, %c0_i32_0 : i32, i32
  }
  func.func @transform_3(%arg0: i32) -> (i32, i32) {
    %c0_i32 = arith.constant 0 : i32
    %c0_i32_0 = arith.constant 0 : i32
    %c0_i32_1 = arith.constant 0 : i32
    return %c0_i32, %c0_i32_0 : i32, i32
  }
  func.func @transform_4(%arg0: i32) -> (i32, i32) {
    %c0_i32 = arith.constant 0 : i32
    %c0_i32_0 = arith.constant 0 : i32
    %c0_i32_1 = arith.constant 0 : i32
    return %c0_i32, %c0_i32_0 : i32, i32
  }
  func.func @transform_5(%arg0: i32) -> (i32, i32) {
    %c0_i32 = arith.constant 0 : i32
    %c0_i32_0 = arith.constant 0 : i32
    return %arg0, %c0_i32 : i32, i32
  }
}

</mosaic_0001>

<llo_original>
// kernel: net_forward.1
$region0: #{net_forward.1}
  #allocation0 [shape = 'u32[]', space=smem, size = 0x4, offset = 0x4, fixed_abs, tag = 'smem constant byte address 0x4 - core index']
  #allocation1 [shape = 'u32[72,128]{1,0:T(1,128)}', space=vmem, size = 0x9000, scoped, tag = 'internal scratch']
  %s0 = inlined_call_operand.vmem [shape: f32[2,1024], index: 0, kind: input, shape index: {}]
  %s1 = inlined_call_operand.hbm [shape: bf16[1024,128], index: 1, kind: input, shape index: {}]
  %s2 = inlined_call_operand.vmem [shape: f32[1,128], index: 2, kind: input, shape index: {}]
  %s3 = inlined_call_operand.vmem [shape: bf16[128,128], index: 3, kind: input, shape index: {}]
  %s4 = inlined_call_operand.vmem [shape: f32[1,128], index: 4, kind: input, shape index: {}]
  %s5 = inlined_call_operand.vmem [shape: bf16[2,128], index: 5, kind: output, shape index: {}]
  %s6 = sld [smem:[#allocation0]]
  $region64: #{net_forward.1} parent=0
    _
  %s8 = ssub.s32 1, %s6
  %s9 = scalar_select 0, %s8, %s6
  $region1: #{net_forward.1} parent=0
    #allocation2 [shape = 'u8[262144]{0}', space=vmem, size = 0x40000, scoped, tag = 'input window, operand 1, single buffered']
    #allocation3 [shape = 's32[1]{0}', space=sflag, size = 0x4, scoped, tag = 'scoped memory for net_forward.1']
    #allocation4 [shape = 'u8[4096]{0}', space=vmem, size = 0x1000, scoped, tag = 'output window, operand 0, single buffered']
    %10 = vsyncpa [#allocation3], 0
    // Predicated region
    $region2: #{net_forward.1} parent=1 // pred_check
      _
    $region3: #{net_forward.1} parent=1 // pred_check_branch
      %12 = sbr.rel (0) target = $region5
    $region4: #{net_forward.1} parent=1 // pred_region
      _
    $region5: #{net_forward.1} parent=1 // pred_fallthru
      _
    // Predicated region
    $region6: #{net_forward.1} parent=1 // pred_check
      _
    $region7: #{net_forward.1} parent=1 // pred_check_branch
      %14 = sbr.rel (0) target = $region9
    $region8: #{net_forward.1} parent=1 // pred_region
      %16 = vsyncadd [#allocation3], 0
      %s17 = sshll.u32 %s1, 4
      %s18 = int_to_ptr.hbm [resolvable:$true] %s17
      %s19 = sshll.u32 [#allocation2], 4
      %s20 = int_to_ptr.vmem [resolvable:$true] %s19
      %25 = dma.hbm_to_vmem [thread:$0]  %s18, 8192, %s20, [#allocation3], 64, 64, 4
    $region9: #{net_forward.1} parent=1 // pred_fallthru
      _
    // Predicated region
    $region10: #{net_forward.1} parent=1 // pred_check
      _
    $region11: #{net_forward.1} parent=1 // pred_check_branch
      %27 = sbr.rel (0) target = $region13
    $region12: #{net_forward.1} parent=1 // pred_region
      _
    $region13: #{net_forward.1} parent=1 // pred_fallthru
      _
    // Predicated region
    $region14: #{net_forward.1} parent=1 // pred_check
      _
    $region15: #{net_forward.1} parent=1 // pred_check_branch
      %29 = sbr.rel (0) target = $region17
    $region16: #{net_forward.1} parent=1 // pred_region
      _
    $region17: #{net_forward.1} parent=1 // pred_fallthru
      _
    // Predicated region
    $region18: #{net_forward.1} parent=1 // pred_check
      _
    $region19: #{net_forward.1} parent=1 // pred_check_branch
      %31 = sbr.rel (0) target = $region21
    $region20: #{net_forward.1} parent=1 // pred_region
      _
    $region21: #{net_forward.1} parent=1 // pred_fallthru
      _
    // Predicated region
    $region22: #{net_forward.1} parent=1 // pred_check
      _
    $region23: #{net_forward.1} parent=1 // pred_check_branch
      %33 = sbr.rel (0) target = $region25
    $region24: #{net_forward.1} parent=1 // pred_region
      %35 = dma.done [#allocation3], 8192
    $region25: #{net_forward.1} parent=1 // pred_fallthru
      _
    %v36 = vld [vmem:[%s0] sm:$0xff]
    %v37 = vld [vmem:[%s0 + $0x8] sm:$0xff]
    %v38 = vld [vmem:[%s0 + $0x10] sm:$0xff]
    %v39 = vld [vmem:[%s0 + $0x18] sm:$0xff]
    %v40 = vld [vmem:[%s0 + $0x20] sm:$0xff]
    %v41 = vld [vmem:[%s0 + $0x28] sm:$0xff]
    %v42 = vld [vmem:[%s0 + $0x30] sm:$0xff]
    %v43 = vld [vmem:[%s0 + $0x38] sm:$0xff]
    %v44 = vld [vmem:[%s0 + $0x40] sm:$0xff]
    %v45 = vld [vmem:[%s0 + $0x48] sm:$0xff]
    %v46 = vld [vmem:[%s0 + $0x50] sm:$0xff]
    %v47 = vld [vmem:[%s0 + $0x58] sm:$0xff]
    %v48 = vld [vmem:[%s0 + $0x60] sm:$0xff]
    %v49 = vld [vmem:[%s0 + $0x68] sm:$0xff]
    %v50 = vld [vmem:[%s0 + $0x70] sm:$0xff]
    %v51 = vld [vmem:[%s0 + $0x78] sm:$0xff]
    %68 = vst [vmem:[#allocation1] ss:$4 sm:$0xff] %v36
    %s69 = scalar_lea.vmem [#allocation1], 1
    %70 = vst [vmem:[%s69] ss:$4 sm:$0xff] %v38
    %s71 = scalar_lea.vmem [#allocation1], 2
    %72 = vst [vmem:[%s71] ss:$4 sm:$0xff] %v40
    %s73 = scalar_lea.vmem [#allocation1], 3
    %74 = vst [vmem:[%s73] ss:$4 sm:$0xff] %v42
    %s75 = scalar_lea.vmem [#allocation1], 32
    %76 = vst [vmem:[%s75] ss:$4 sm:$0xff] %v37
    %s77 = scalar_lea.vmem [#allocation1], 33
    %78 = vst [vmem:[%s77] ss:$4 sm:$0xff] %v39
    %s79 = scalar_lea.vmem [#allocation1], 34
    %80 = vst [vmem:[%s79] ss:$4 sm:$0xff] %v41
    %s81 = scalar_lea.vmem [#allocation1], 35
    %82 = vst [vmem:[%s81] ss:$4 sm:$0xff] %v43
    %v83 = vld.sshfl [vmem:[#allocation1] sm:$0xff pattern:$0x73625140]
    %v84 = vld.sshfl [vmem:[#allocation1 + $0x8] sm:$0xff pattern:$0x73625140]
    %v85 = vld.sshfl [vmem:[#allocation1 + $0x10] sm:$0xff pattern:$0x73625140]
    %v86 = vld.sshfl [vmem:[#allocation1 + $0x18] sm:$0xff pattern:$0x73625140]
    %v87 = vld.sshfl [vmem:[#allocation1 + $0x20] sm:$0xff pattern:$0x73625140]
    %v88 = vld.sshfl [vmem:[#allocation1 + $0x28] sm:$0xff pattern:$0x73625140]
    %v89 = vld.sshfl [vmem:[#allocation1 + $0x30] sm:$0xff pattern:$0x73625140]
    %v90 = vld.sshfl [vmem:[#allocation1 + $0x38] sm:$0xff pattern:$0x73625140]
    %91 = vst [vmem:[#allocation1] ss:$4 sm:$0xff] %v44
    %92 = vst [vmem:[%s69] ss:$4 sm:$0xff] %v46
    %93 = vst [vmem:[%s71] ss:$4 sm:$0xff] %v48
    %94 = vst [vmem:[%s73] ss:$4 sm:$0xff] %v50
    %95 = vst [vmem:[%s75] ss:$4 sm:$0xff] %v45
    %96 = vst [vmem:[%s77] ss:$4 sm:$0xff] %v47
    %97 = vst [vmem:[%s79] ss:$4 sm:$0xff] %v49
    %98 = vst [vmem:[%s81] ss:$4 sm:$0xff] %v51
    %v99 = vld.sshfl [vmem:[#allocation1] sm:$0xff pattern:$0x73625140]
    %v100 = vld.sshfl [vmem:[#allocation1 + $0x8] sm:$0xff pattern:$0x73625140]
    %v101 = vld.sshfl [vmem:[#allocation1 + $0x10] sm:$0xff pattern:$0x73625140]
    %v102 = vld.sshfl [vmem:[#allocation1 + $0x18] sm:$0xff pattern:$0x73625140]
    %v103 = vld.sshfl [vmem:[#allocation1 + $0x20] sm:$0xff pattern:$0x73625140]
    %v104 = vld.sshfl [vmem:[#allocation1 + $0x28] sm:$0xff pattern:$0x73625140]
    %v105 = vld.sshfl [vmem:[#allocation1 + $0x30] sm:$0xff pattern:$0x73625140]
    %v106 = vld.sshfl [vmem:[#allocation1 + $0x38] sm:$0xff pattern:$0x73625140]
    %v123 = vpack.c.bf16 %v99, %v83
    %v124 = vpack.c.bf16 %v100, %v84
    %v125 = vpack.c.bf16 %v101, %v85
    %v126 = vpack.c.bf16 %v102, %v86
    %v127 = vpack.c.bf16 %v103, %v87
    %v128 = vpack.c.bf16 %v104, %v88
    %v129 = vpack.c.bf16 %v105, %v89
    %v130 = vpack.c.bf16 %v106, %v90
    %v131 = vld [vmem:[#allocation2] sm:$0xf]
    %v132 = vld [vmem:[#allocation2 + $0x4] sm:$0xf]
    %v133 = vld [vmem:[#allocation2 + $0x8] sm:$0xf]
    %v134 = vld [vmem:[#allocation2 + $0xc] sm:$0xf]
    %v135 = vld [vmem:[#allocation2 + $0x10] sm:$0xf]
    %v136 = vld [vmem:[#allocation2 + $0x14] sm:$0xf]
    %v137 = vld [vmem:[#allocation2 + $0x18] sm:$0xf]
    %v138 = vld [vmem:[#allocation2 + $0x1c] sm:$0xf]
    %v139 = vld [vmem:[#allocation2 + $0x20] sm:$0xf]
    %v140 = vld [vmem:[#allocation2 + $0x24] sm:$0xf]
    %v141 = vld [vmem:[#allocation2 + $0x28] sm:$0xf]
    %v142 = vld [vmem:[#allocation2 + $0x2c] sm:$0xf]
    %v143 = vld [vmem:[#allocation2 + $0x30] sm:$0xf]
    %v144 = vld [vmem:[#allocation2 + $0x34] sm:$0xf]
    %v145 = vld [vmem:[#allocation2 + $0x38] sm:$0xf]
    %v146 = vld [vmem:[#allocation2 + $0x3c] sm:$0xf]
    %v147 = vld [vmem:[#allocation2 + $0x40] sm:$0xf]
    %v148 = vld [vmem:[#allocation2 + $0x44] sm:$0xf]
    %v149 = vld [vmem:[#allocation2 + $0x48] sm:$0xf]
    %v150 = vld [vmem:[#allocation2 + $0x4c] sm:$0xf]
    %v151 = vld [vmem:[#allocation2 + $0x50] sm:$0xf]
    %v152 = vld [vmem:[#allocation2 + $0x54] sm:$0xf]
    %v153 = vld [vmem:[#allocation2 + $0x58] sm:$0xf]
    %v154 = vld [vmem:[#allocation2 + $0x5c] sm:$0xf]
    %v155 = vld [vmem:[#allocation2 + $0x60] sm:$0xf]
    %v156 = vld [vmem:[#allocation2 + $0x64] sm:$0xf]
    %v157 = vld [vmem:[#allocation2 + $0x68] sm:$0xf]
    %v158 = vld [vmem:[#allocation2 + $0x6c] sm:$0xf]
    %v159 = vld [vmem:[#allocation2 + $0x70] sm:$0xf]
    %v160 = vld [vmem:[#allocation2 + $0x74] sm:$0xf]
    %v161 = vld [vmem:[#allocation2 + $0x78] sm:$0xf]
    %v162 = vld [vmem:[#allocation2 + $0x7c] sm:$0xf]
    %v163 = vld [vmem:[#allocation2 + $0x80] sm:$0xf]
    %v164 = vld [vmem:[#allocation2 + $0x84] sm:$0xf]
    %v165 = vld [vmem:[#allocation2 + $0x88] sm:$0xf]
    %v166 = vld [vmem:[#allocation2 + $0x8c] sm:$0xf]
    %v167 = vld [vmem:[#allocation2 + $0x90] sm:$0xf]
    %v168 = vld [vmem:[#allocation2 + $0x94] sm:$0xf]
    %v169 = vld [vmem:[#allocation2 + $0x98] sm:$0xf]
    %v170 = vld [vmem:[#allocation2 + $0x9c] sm:$0xf]
    %v171 = vld [vmem:[#allocation2 + $0xa0] sm:$0xf]
    %v172 = vld [vmem:[#allocation2 + $0xa4] sm:$0xf]
    %v173 = vld [vmem:[#allocation2 + $0xa8] sm:$0xf]
    %v174 = vld [vmem:[#allocation2 + $0xac] sm:$0xf]
    %v175 = vld [vmem:[#allocation2 + $0xb0] sm:$0xf]
    %v176 = vld [vmem:[#allocation2 + $0xb4] sm:$0xf]
    %v177 = vld [vmem:[#allocation2 + $0xb8] sm:$0xf]
    %v178 = vld [vmem:[#allocation2 + $0xbc] sm:$0xf]
    %v179 = vld [vmem:[#allocation2 + $0xc0] sm:$0xf]
    %v180 = vld [vmem:[#allocation2 + $0xc4] sm:$0xf]
    %v181 = vld [vmem:[#allocation2 + $0xc8] sm:$0xf]
    %v182 = vld [vmem:[#allocation2 + $0xcc] sm:$0xf]
    %v183 = vld [vmem:[#allocation2 + $0xd0] sm:$0xf]
    %v184 = vld [vmem:[#allocation2 + $0xd4] sm:$0xf]
    %v185 = vld [vmem:[#allocation2 + $0xd8] sm:$0xf]
    %v186 = vld [vmem:[#allocation2 + $0xdc] sm:$0xf]
    %v187 = vld [vmem:[#allocation2 + $0xe0] sm:$0xf]
    %v188 = vld [vmem:[#allocation2 + $0xe4] sm:$0xf]
    %v189 = vld [vmem:[#allocation2 + $0xe8] sm:$0xf]
    %v190 = vld [vmem:[#allocation2 + $0xec] sm:$0xf]
    %v191 = vld [vmem:[#allocation2 + $0xf0] sm:$0xf]
    %v192 = vld [vmem:[#allocation2 + $0xf4] sm:$0xf]
    %v193 = vld [vmem:[#allocation2 + $0xf8] sm:$0xf]
    %v194 = vld [vmem:[#allocation2 + $0xfc] sm:$0xf]
    %v195 = vld [vmem:[#allocation2 + $0x100] sm:$0xf]
    %v196 = vld [vmem:[#allocation2 + $0x104] sm:$0xf]
    %v197 = vld [vmem:[#allocation2 + $0x108] sm:$0xf]
    %v198 = vld [vmem:[#allocation2 + $0x10c] sm:$0xf]
    %v199 = vld [vmem:[#allocation2 + $0x110] sm:$0xf]
    %v200 = vld [vmem:[#allocation2 + $0x114] sm:$0xf]
    %v201 = vld [vmem:[#allocation2 + $0x118] sm:$0xf]
    %v202 = vld [vmem:[#allocation2 + $0x11c] sm:$0xf]
    %v203 = vld [vmem:[#allocation2 + $0x120] sm:$0xf]
    %v204 = vld [vmem:[#allocation2 + $0x124] sm:$0xf]
    %v205 = vld [vmem:[#allocation2 + $0x128] sm:$0xf]
    %v206 = vld [vmem:[#allocation2 + $0x12c] sm:$0xf]
    %v207 = vld [vmem:[#allocation2 + $0x130] sm:$0xf]
    %v208 = vld [vmem:[#allocation2 + $0x134] sm:$0xf]
    %v209 = vld [vmem:[#allocation2 + $0x138] sm:$0xf]
    %v210 = vld [vmem:[#allocation2 + $0x13c] sm:$0xf]
    %v211 = vld [vmem:[#allocation2 + $0x140] sm:$0xf]
    %v212 = vld [vmem:[#allocation2 + $0x144] sm:$0xf]
    %v213 = vld [vmem:[#allocation2 + $0x148] sm:$0xf]
    %v214 = vld [vmem:[#allocation2 + $0x14c] sm:$0xf]
    %v215 = vld [vmem:[#allocation2 + $0x150] sm:$0xf]
    %v216 = vld [vmem:[#allocation2 + $0x154] sm:$0xf]
    %v217 = vld [vmem:[#allocation2 + $0x158] sm:$0xf]
    %v218 = vld [vmem:[#allocation2 + $0x15c] sm:$0xf]
    %v219 = vld [vmem:[#allocation2 + $0x160] sm:$0xf]
    %v220 = vld [vmem:[#allocation2 + $0x164] sm:$0xf]
    %v221 = vld [vmem:[#allocation2 + $0x168] sm:$0xf]
    %v222 = vld [vmem:[#allocation2 + $0x16c] sm:$0xf]
    %v223 = vld [vmem:[#allocation2 + $0x170] sm:$0xf]
    %v224 = vld [vmem:[#allocation2 + $0x174] sm:$0xf]
    %v225 = vld [vmem:[#allocation2 + $0x178] sm:$0xf]
    %v226 = vld [vmem:[#allocation2 + $0x17c] sm:$0xf]
    %v227 = vld [vmem:[#allocation2 + $0x180] sm:$0xf]
    %v228 = vld [vmem:[#allocation2 + $0x184] sm:$0xf]
    %v229 = vld [vmem:[#allocation2 + $0x188] sm:$0xf]
    %v230 = vld [vmem:[#allocation2 + $0x18c] sm:$0xf]
    %v231 = vld [vmem:[#allocation2 + $0x190] sm:$0xf]
    %v232 = vld [vmem:[#allocation2 + $0x194] sm:$0xf]
    %v233 = vld [vmem:[#allocation2 + $0x198] sm:$0xf]
    %v234 = vld [vmem:[#allocation2 + $0x19c] sm:$0xf]
    %v235 = vld [vmem:[#allocation2 + $0x1a0] sm:$0xf]
    %v236 = vld [vmem:[#allocation2 + $0x1a4] sm:$0xf]
    %v237 = vld [vmem:[#allocation2 + $0x1a8] sm:$0xf]
    %v238 = vld [vmem:[#allocation2 + $0x1ac] sm:$0xf]
    %v239 = vld [vmem:[#allocation2 + $0x1b0] sm:$0xf]
    %v240 = vld [vmem:[#allocation2 + $0x1b4] sm:$0xf]
    %v241 = vld [vmem:[#allocation2 + $0x1b8] sm:$0xf]
    %v242 = vld [vmem:[#allocation2 + $0x1bc] sm:$0xf]
    %v243 = vld [vmem:[#allocation2 + $0x1c0] sm:$0xf]
    %v244 = vld [vmem:[#allocation2 + $0x1c4] sm:$0xf]
    %v245 = vld [vmem:[#allocation2 + $0x1c8] sm:$0xf]
    %v246 = vld [vmem:[#allocation2 + $0x1cc] sm:$0xf]
    %v247 = vld [vmem:[#allocation2 + $0x1d0] sm:$0xf]
    %v248 = vld [vmem:[#allocation2 + $0x1d4] sm:$0xf]
    %v249 = vld [vmem:[#allocation2 + $0x1d8] sm:$0xf]
    %v250 = vld [vmem:[#allocation2 + $0x1dc] sm:$0xf]
    %v251 = vld [vmem:[#allocation2 + $0x1e0] sm:$0xf]
    %v252 = vld [vmem:[#allocation2 + $0x1e4] sm:$0xf]
    %v253 = vld [vmem:[#allocation2 + $0x1e8] sm:$0xf]
    %v254 = vld [vmem:[#allocation2 + $0x1ec] sm:$0xf]
    %v255 = vld [vmem:[#allocation2 + $0x1f0] sm:$0xf]
    %v256 = vld [vmem:[#allocation2 + $0x1f4] sm:$0xf]
    %v257 = vld [vmem:[#allocation2 + $0x1f8] sm:$0xf]
    %v258 = vld [vmem:[#allocation2 + $0x1fc] sm:$0xf]
    %v259 = vld [vmem:[%s2] sm:$0x1]
    %v261 = vperm.slane %v259, 0
    %v391 = vunpack.c.l.b16 %v131
    %v392 = vunpack.c.l.b16 %v132
    %v393 = vunpack.c.l.b16 %v133
    %v394 = vunpack.c.l.b16 %v134
    %v395 = vunpack.c.l.b16 %v135
    %v396 = vunpack.c.l.b16 %v136
    %v397 = vunpack.c.l.b16 %v137
    %v398 = vunpack.c.l.b16 %v138
    %v399 = vunpack.c.l.b16 %v139
    %v400 = vunpack.c.l.b16 %v140
    %v401 = vunpack.c.l.b16 %v141
    %v402 = vunpack.c.l.b16 %v142
    %v403 = vunpack.c.l.b16 %v143
    %v404 = vunpack.c.l.b16 %v144
    %v405 = vunpack.c.l.b16 %v145
    %v406 = vunpack.c.l.b16 %v146
    %v407 = vunpack.c.l.b16 %v147
    %v408 = vunpack.c.l.b16 %v148
    %v409 = vunpack.c.l.b16 %v149
    %v410 = vunpack.c.l.b16 %v150
    %v411 = vunpack.c.l.b16 %v151
    %v412 = vunpack.c.l.b16 %v152
    %v413 = vunpack.c.l.b16 %v153
    %v414 = vunpack.c.l.b16 %v154
    %v415 = vunpack.c.l.b16 %v155
    %v416 = vunpack.c.l.b16 %v156
    %v417 = vunpack.c.l.b16 %v157
    %v418 = vunpack.c.l.b16 %v158
    %v419 = vunpack.c.l.b16 %v159
    %v420 = vunpack.c.l.b16 %v160
    %v421 = vunpack.c.l.b16 %v161
    %v422 = vunpack.c.l.b16 %v162
    %v423 = vunpack.c.l.b16 %v163
    %v424 = vunpack.c.l.b16 %v164
    %v425 = vunpack.c.l.b16 %v165
    %v426 = vunpack.c.l.b16 %v166
    %v427 = vunpack.c.l.b16 %v167
    %v428 = vunpack.c.l.b16 %v168
    %v429 = vunpack.c.l.b16 %v169
    %v430 = vunpack.c.l.b16 %v170
    %v431 = vunpack.c.l.b16 %v171
    %v432 = vunpack.c.l.b16 %v172
    %v433 = vunpack.c.l.b16 %v173
    %v434 = vunpack.c.l.b16 %v174
    %v435 = vunpack.c.l.b16 %v175
    %v436 = vunpack.c.l.b16 %v176
    %v437 = vunpack.c.l.b16 %v177
    %v438 = vunpack.c.l.b16 %v178
    %v439 = vunpack.c.l.b16 %v179
    %v440 = vunpack.c.l.b16 %v180
    %v441 = vunpack.c.l.b16 %v181
    %v442 = vunpack.c.l.b16 %v182
    %v443 = vunpack.c.l.b16 %v183
    %v444 = vunpack.c.l.b16 %v184
    %v445 = vunpack.c.l.b16 %v185
    %v446 = vunpack.c.l.b16 %v186
    %v447 = vunpack.c.l.b16 %v187
    %v448 = vunpack.c.l.b16 %v188
    %v449 = vunpack.c.l.b16 %v189
    %v450 = vunpack.c.l.b16 %v190
    %v451 = vunpack.c.l.b16 %v191
    %v452 = vunpack.c.l.b16 %v192
    %v453 = vunpack.c.l.b16 %v193
    %v454 = vunpack.c.l.b16 %v194
    %v455 = vunpack.c.l.b16 %v195
    %v456 = vunpack.c.l.b16 %v196
    %v457 = vunpack.c.l.b16 %v197
    %v458 = vunpack.c.l.b16 %v198
    %v459 = vunpack.c.l.b16 %v199
    %v460 = vunpack.c.l.b16 %v200
    %v461 = vunpack.c.l.b16 %v201
    %v462 = vunpack.c.l.b16 %v202
    %v463 = vunpack.c.l.b16 %v203
    %v464 = vunpack.c.l.b16 %v204
    %v465 = vunpack.c.l.b16 %v205
    %v466 = vunpack.c.l.b16 %v206
    %v467 = vunpack.c.l.b16 %v207
    %v468 = vunpack.c.l.b16 %v208
    %v469 = vunpack.c.l.b16 %v209
    %v470 = vunpack.c.l.b16 %v210
    %v471 = vunpack.c.l.b16 %v211
    %v472 = vunpack.c.l.b16 %v212
    %v473 = vunpack.c.l.b16 %v213
    %v474 = vunpack.c.l.b16 %v214
    %v475 = vunpack.c.l.b16 %v215
    %v476 = vunpack.c.l.b16 %v216
    %v477 = vunpack.c.l.b16 %v217
    %v478 = vunpack.c.l.b16 %v218
    %v479 = vunpack.c.l.b16 %v219
    %v480 = vunpack.c.l.b16 %v220
    %v481 = vunpack.c.l.b16 %v221
    %v482 = vunpack.c.l.b16 %v222
    %v483 = vunpack.c.l.b16 %v223
    %v484 = vunpack.c.l.b16 %v224
    %v485 = vunpack.c.l.b16 %v225
    %v486 = vunpack.c.l.b16 %v226
    %v487 = vunpack.c.l.b16 %v227
    %v488 = vunpack.c.l.b16 %v228
    %v489 = vunpack.c.l.b16 %v229
    %v490 = vunpack.c.l.b16 %v230
    %v491 = vunpack.c.l.b16 %v231
    %v492 = vunpack.c.l.b16 %v232
    %v493 = vunpack.c.l.b16 %v233
    %v494 = vunpack.c.l.b16 %v234
    %v495 = vunpack.c.l.b16 %v235
    %v496 = vunpack.c.l.b16 %v236
    %v497 = vunpack.c.l.b16 %v237
    %v498 = vunpack.c.l.b16 %v238
    %v499 = vunpack.c.l.b16 %v239
    %v500 = vunpack.c.l.b16 %v240
    %v501 = vunpack.c.l.b16 %v241
    %v502 = vunpack.c.l.b16 %v242
    %v503 = vunpack.c.l.b16 %v243
    %v504 = vunpack.c.l.b16 %v244
    %v505 = vunpack.c.l.b16 %v245
    %v506 = vunpack.c.l.b16 %v246
    %v507 = vunpack.c.l.b16 %v247
    %v508 = vunpack.c.l.b16 %v248
    %v509 = vunpack.c.l.b16 %v249
    %v510 = vunpack.c.l.b16 %v250
    %v511 = vunpack.c.l.b16 %v251
    %v512 = vunpack.c.l.b16 %v252
    %v513 = vunpack.c.l.b16 %v253
    %v514 = vunpack.c.l.b16 %v254
    %v515 = vunpack.c.l.b16 %v255
    %v516 = vunpack.c.l.b16 %v256
    %v517 = vunpack.c.l.b16 %v257
    %v518 = vunpack.c.l.b16 %v258
    %v519 = vpack.c.b16 %v392, %v391
    %v520 = vpack.c.b16 %v394, %v393
    %v521 = vpack.c.b16 %v396, %v395
    %v522 = vpack.c.b16 %v398, %v397
    %v523 = vpack.c.b16 %v400, %v399
    %v524 = vpack.c.b16 %v402, %v401
    %v525 = vpack.c.b16 %v404, %v403
    %v526 = vpack.c.b16 %v406, %v405
    %v527 = vpack.c.b16 %v408, %v407
    %v528 = vpack.c.b16 %v410, %v409
    %v529 = vpack.c.b16 %v412, %v411
    %v530 = vpack.c.b16 %v414, %v413
    %v531 = vpack.c.b16 %v416, %v415
    %v532 = vpack.c.b16 %v418, %v417
    %v533 = vpack.c.b16 %v420, %v419
    %v534 = vpack.c.b16 %v422, %v421
    %v535 = vpack.c.b16 %v424, %v423
    %v536 = vpack.c.b16 %v426, %v425
    %v537 = vpack.c.b16 %v428, %v427
    %v538 = vpack.c.b16 %v430, %v429
    %v539 = vpack.c.b16 %v432, %v431
    %v540 = vpack.c.b16 %v434, %v433
    %v541 = vpack.c.b16 %v436, %v435
    %v542 = vpack.c.b16 %v438, %v437
    %v543 = vpack.c.b16 %v440, %v439
    %v544 = vpack.c.b16 %v442, %v441
    %v545 = vpack.c.b16 %v444, %v443
    %v546 = vpack.c.b16 %v446, %v445
    %v547 = vpack.c.b16 %v448, %v447
    %v548 = vpack.c.b16 %v450, %v449
    %v549 = vpack.c.b16 %v452, %v451
    %v550 = vpack.c.b16 %v454, %v453
    %v551 = vpack.c.b16 %v456, %v455
    %v552 = vpack.c.b16 %v458, %v457
    %v553 = vpack.c.b16 %v460, %v459
    %v554 = vpack.c.b16 %v462, %v461
    %v555 = vpack.c.b16 %v464, %v463
    %v556 = vpack.c.b16 %v466, %v465
    %v557 = vpack.c.b16 %v468, %v467
    %v558 = vpack.c.b16 %v470, %v469
    %v559 = vpack.c.b16 %v472, %v471
    %v560 = vpack.c.b16 %v474, %v473
    %v561 = vpack.c.b16 %v476, %v475
    %v562 = vpack.c.b16 %v478, %v477
    %v563 = vpack.c.b16 %v480, %v479
    %v564 = vpack.c.b16 %v482, %v481
    %v565 = vpack.c.b16 %v484, %v483
    %v566 = vpack.c.b16 %v486, %v485
    %v567 = vpack.c.b16 %v488, %v487
    %v568 = vpack.c.b16 %v490, %v489
    %v569 = vpack.c.b16 %v492, %v491
    %v570 = vpack.c.b16 %v494, %v493
    %v571 = vpack.c.b16 %v496, %v495
    %v572 = vpack.c.b16 %v498, %v497
    %v573 = vpack.c.b16 %v500, %v499
    %v574 = vpack.c.b16 %v502, %v501
    %v575 = vpack.c.b16 %v504, %v503
    %v576 = vpack.c.b16 %v506, %v505
    %v577 = vpack.c.b16 %v508, %v507
    %v578 = vpack.c.b16 %v510, %v509
    %v579 = vpack.c.b16 %v512, %v511
    %v580 = vpack.c.b16 %v514, %v513
    %v581 = vpack.c.b16 %v516, %v515
    %v582 = vpack.c.b16 %v518, %v517
    %647 = vmatpush.bf16.msra.mxu0 %v526
    %648 = vmatpush.bf16.msra.mxu0 %v525
    %649 = vmatpush.bf16.msra.mxu0 %v524
    %650 = vmatpush.bf16.msra.mxu0 %v523
    %651 = vmatpush.bf16.msra.mxu0 %v522
    %652 = vmatpush.bf16.msra.mxu0 %v521
    %653 = vmatpush.bf16.msra.mxu0 %v520
    %654 = vmatpush.bf16.msra.mxu0 %v519
    %655 = vmatmul.bf16.gmra.mxu0 %v123
    %v656 = vpop.f32.mrf.mxu0
    %v657 = vadd.f32 %v261, %v656
    %v658 = vpop.f32.mrf.mxu0
    %v659 = vadd.f32 %v261, %v658
    %660 = vdwg.mxu0
    %661 = vmatpush.bf16.msra.mxu0 %v534
    %662 = vmatpush.bf16.msra.mxu0 %v533
    %663 = vmatpush.bf16.msra.mxu0 %v532
    %664 = vmatpush.bf16.msra.mxu0 %v531
    %665 = vmatpush.bf16.msra.mxu0 %v530
    %666 = vmatpush.bf16.msra.mxu0 %v529
    %667 = vmatpush.bf16.msra.mxu0 %v528
    %668 = vmatpush.bf16.msra.mxu0 %v527
    %669 = vmatmul.bf16.gmra.mxu0 %v124
    %v670 = vpop.f32.mrf.mxu0
    %v671 = vadd.f32 %v657, %v670
    %v672 = vpop.f32.mrf.mxu0
    %v673 = vadd.f32 %v659, %v672
    %674 = vdwg.mxu0
    %675 = vmatpush.bf16.msra.mxu0 %v542
    %676 = vmatpush.bf16.msra.mxu0 %v541
    %677 = vmatpush.bf16.msra.mxu0 %v540
    %678 = vmatpush.bf16.msra.mxu0 %v539
    %679 = vmatpush.bf16.msra.mxu0 %v538
    %680 = vmatpush.bf16.msra.mxu0 %v537
    %681 = vmatpush.bf16.msra.mxu0 %v536
    %682 = vmatpush.bf16.msra.mxu0 %v535
    %683 = vmatmul.bf16.gmra.mxu0 %v125
    %v684 = vpop.f32.mrf.mxu0
    %v685 = vadd.f32 %v671, %v684
    %v686 = vpop.f32.mrf.mxu0
    %v687 = vadd.f32 %v673, %v686
    %688 = vdwg.mxu0
    %689 = vmatpush.bf16.msra.mxu0 %v550
    %690 = vmatpush.bf16.msra.mxu0 %v549
    %691 = vmatpush.bf16.msra.mxu0 %v548
    %692 = vmatpush.bf16.msra.mxu0 %v547
    %693 = vmatpush.bf16.msra.mxu0 %v546
    %694 = vmatpush.bf16.msra.mxu0 %v545
    %695 = vmatpush.bf16.msra.mxu0 %v544
    %696 = vmatpush.bf16.msra.mxu0 %v543
    %697 = vmatmul.bf16.gmra.mxu0 %v126
    %v698 = vpop.f32.mrf.mxu0
    %v699 = vadd.f32 %v685, %v698
    %v700 = vpop.f32.mrf.mxu0
    %v701 = vadd.f32 %v687, %v700
    %702 = vdwg.mxu0
    %703 = vmatpush.bf16.msra.mxu0 %v558
    %704 = vmatpush.bf16.msra.mxu0 %v557
    %705 = vmatpush.bf16.msra.mxu0 %v556
    %706 = vmatpush.bf16.msra.mxu0 %v555
    %707 = vmatpush.bf16.msra.mxu0 %v554
    %708 = vmatpush.bf16.msra.mxu0 %v553
    %709 = vmatpush.bf16.msra.mxu0 %v552
    %710 = vmatpush.bf16.msra.mxu0 %v551
    %711 = vmatmul.bf16.gmra.mxu0 %v127
    %v712 = vpop.f32.mrf.mxu0
    %v713 = vadd.f32 %v699, %v712
    %v714 = vpop.f32.mrf.mxu0
    %v715 = vadd.f32 %v701, %v714
    %716 = vdwg.mxu0
    %717 = vmatpush.bf16.msra.mxu0 %v566
    %718 = vmatpush.bf16.msra.mxu0 %v565
    %719 = vmatpush.bf16.msra.mxu0 %v564
    %720 = vmatpush.bf16.msra.mxu0 %v563
    %721 = vmatpush.bf16.msra.mxu0 %v562
    %722 = vmatpush.bf16.msra.mxu0 %v561
    %723 = vmatpush.bf16.msra.mxu0 %v560
    %724 = vmatpush.bf16.msra.mxu0 %v559
    %725 = vmatmul.bf16.gmra.mxu0 %v128
    %v726 = vpop.f32.mrf.mxu0
    %v727 = vadd.f32 %v713, %v726
    %v728 = vpop.f32.mrf.mxu0
    %v729 = vadd.f32 %v715, %v728
    %730 = vdwg.mxu0
    %731 = vmatpush.bf16.msra.mxu0 %v574
    %732 = vmatpush.bf16.msra.mxu0 %v573
    %733 = vmatpush.bf16.msra.mxu0 %v572
    %734 = vmatpush.bf16.msra.mxu0 %v571
    %735 = vmatpush.bf16.msra.mxu0 %v570
    %736 = vmatpush.bf16.msra.mxu0 %v569
    %737 = vmatpush.bf16.msra.mxu0 %v568
    %738 = vmatpush.bf16.msra.mxu0 %v567
    %739 = vmatmul.bf16.gmra.mxu0 %v129
    %v740 = vpop.f32.mrf.mxu0
    %v741 = vadd.f32 %v727, %v740
    %v742 = vpop.f32.mrf.mxu0
    %v743 = vadd.f32 %v729, %v742
    %744 = vdwg.mxu0
    %745 = vmatpush.bf16.msra.mxu0 %v582
    %746 = vmatpush.bf16.msra.mxu0 %v581
    %747 = vmatpush.bf16.msra.mxu0 %v580
    %748 = vmatpush.bf16.msra.mxu0 %v579
    %749 = vmatpush.bf16.msra.mxu0 %v578
    %750 = vmatpush.bf16.msra.mxu0 %v577
    %751 = vmatpush.bf16.msra.mxu0 %v576
    %752 = vmatpush.bf16.msra.mxu0 %v575
    %753 = vmatmul.bf16.gmra.mxu0 %v130
    %v754 = vpop.f32.mrf.mxu0
    %v755 = vadd.f32 %v741, %v754
    %v756 = vpop.f32.mrf.mxu0
    %v757 = vadd.f32 %v743, %v756
    %758 = vdwg.mxu0
    %v759 = vmax.f32 %v755, 0.0
    %v760 = vmax.f32 %v757, 0.0
    %v761 = vpack.c.bf16 %v760, %v759
    %v762 = vld [vmem:[%s3] sm:$0xf]
    %v763 = vld [vmem:[%s3 + $0x4] sm:$0xf]
    %v764 = vld [vmem:[%s3 + $0x8] sm:$0xf]
    %v765 = vld [vmem:[%s3 + $0xc] sm:$0xf]
    %v766 = vld [vmem:[%s3 + $0x10] sm:$0xf]
    %v767 = vld [vmem:[%s3 + $0x14] sm:$0xf]
    %v768 = vld [vmem:[%s3 + $0x18] sm:$0xf]
    %v769 = vld [vmem:[%s3 + $0x1c] sm:$0xf]
    %v770 = vld [vmem:[%s3 + $0x20] sm:$0xf]
    %v771 = vld [vmem:[%s3 + $0x24] sm:$0xf]
    %v772 = vld [vmem:[%s3 + $0x28] sm:$0xf]
    %v773 = vld [vmem:[%s3 + $0x2c] sm:$0xf]
    %v774 = vld [vmem:[%s3 + $0x30] sm:$0xf]
    %v775 = vld [vmem:[%s3 + $0x34] sm:$0xf]
    %v776 = vld [vmem:[%s3 + $0x38] sm:$0xf]
    %v777 = vld [vmem:[%s3 + $0x3c] sm:$0xf]
    %v778 = vld [vmem:[%s4] sm:$0x1]
    %v780 = vperm.slane %v778, 0
    %v798 = vunpack.c.l.b16 %v762
    %v799 = vunpack.c.l.b16 %v763
    %v800 = vunpack.c.l.b16 %v764
    %v801 = vunpack.c.l.b16 %v765
    %v802 = vunpack.c.l.b16 %v766
    %v803 = vunpack.c.l.b16 %v767
    %v804 = vunpack.c.l.b16 %v768
    %v805 = vunpack.c.l.b16 %v769
    %v806 = vunpack.c.l.b16 %v770
    %v807 = vunpack.c.l.b16 %v771
    %v808 = vunpack.c.l.b16 %v772
    %v809 = vunpack.c.l.b16 %v773
    %v810 = vunpack.c.l.b16 %v774
    %v811 = vunpack.c.l.b16 %v775
    %v812 = vunpack.c.l.b16 %v776
    %v813 = vunpack.c.l.b16 %v777
    %v814 = vpack.c.b16 %v799, %v798
    %v815 = vpack.c.b16 %v801, %v800
    %v816 = vpack.c.b16 %v803, %v802
    %v817 = vpack.c.b16 %v805, %v804
    %v818 = vpack.c.b16 %v807, %v806
    %v819 = vpack.c.b16 %v809, %v808
    %v820 = vpack.c.b16 %v811, %v810
    %v821 = vpack.c.b16 %v813, %v812
    %830 = vmatpush.bf16.msra.mxu0 %v821
    %831 = vmatpush.bf16.msra.mxu0 %v820
    %832 = vmatpush.bf16.msra.mxu0 %v819
    %833 = vmatpush.bf16.msra.mxu0 %v818
    %834 = vmatpush.bf16.msra.mxu0 %v817
    %835 = vmatpush.bf16.msra.mxu0 %v816
    %836 = vmatpush.bf16.msra.mxu0 %v815
    %837 = vmatpush.bf16.msra.mxu0 %v814
    %838 = vmatmul.bf16.gmra.mxu0 %v761
    %v839 = vpop.f32.mrf.mxu0
    %v840 = vadd.f32 %v780, %v839
    %v841 = vpop.f32.mrf.mxu0
    %v842 = vadd.f32 %v780, %v841
    %843 = vdwg.mxu0
    %844 = vmax.xlane.f32.xlu0 %v840
    %v845 = vpop.xlane.xlu0 %844
    %846 = vmax.xlane.f32.xlu0 %v842
    %v847 = vpop.xlane.xlu0 %846
    %v848 = vsub.f32 %v840, %v845
    %v849 = vsub.f32 %v842, %v847
    %v850 = vmul.f32 %v848, 1.442695
    %v851 = vpow.pop %v850
    %v852 = vmul.f32 %v849, 1.442695
    %v853 = vpow.pop %v852
    %854 = vadd.xlane.f32.xlu0 %v851
    %v855 = vpop.xlane.xlu0 %854
    %856 = vadd.xlane.f32.xlu0 %v853
    %v857 = vpop.xlane.xlu0 %856
    %v858 = vrcp.pop %v855
    %v859 = vrcp.pop %v857
    %v860 = vmul.f32 %v851, %v858
    %v861 = vmul.f32 %v853, %v859
    %v862 = vpack.c.bf16 %v860, %v860
    %v863 = vpack.c.bf16 %v861, %v861
    %v866 = vrot.slane %v862, 3
    %v867 = vrot.slane %v863, 3
    %vm868 = vcmask 1040384
    %v871 = vsel %vm868, %v862, %v866
    %vm872 = vcmask 1041409
    %v873 = vsel %vm872, %v862, %v866
    %v875 = vrot.slane %v873, 1
    %vm876 = vcmask 1042434
    %v877 = vsel %vm876, %v862, %v866
    %v879 = vrot.slane %v877, 2
    %vm880 = vcmask 1043459
    %v881 = vsel %vm880, %v862, %v866
    %v883 = vrot.slane %v881, 3
    %v886 = vsel %vm868, %v863, %v867
    %v887 = vsel %vm872, %v863, %v867
    %v889 = vrot.slane %v887, 1
    %v890 = vsel %vm876, %v863, %v867
    %v892 = vrot.slane %v890, 2
    %v893 = vsel %vm880, %v863, %v867
    %v895 = vrot.slane %v893, 3
    %904 = vst [vmem:[#allocation4] sm:$0x1] %v871
    %905 = vst [vmem:[#allocation4 + $0x1] sm:$0x1] %v875
    %906 = vst [vmem:[#allocation4 + $0x2] sm:$0x1] %v879
    %907 = vst [vmem:[#allocation4 + $0x3] sm:$0x1] %v883
    %908 = vst [vmem:[#allocation4 + $0x4] sm:$0x1] %v886
    %909 = vst [vmem:[#allocation4 + $0x5] sm:$0x1] %v889
    %910 = vst [vmem:[#allocation4 + $0x6] sm:$0x1] %v892
    %911 = vst [vmem:[#allocation4 + $0x7] sm:$0x1] %v895
    // Predicated region
    $region26: #{net_forward.1} parent=1 // pred_check
      _
    $region27: #{net_forward.1} parent=1 // pred_check_branch
      %913 = sbr.rel (0) target = $region29
    $region28: #{net_forward.1} parent=1 // pred_region
      // Predicated region
      $region30: #{net_forward.1} parent=28 // pred_check
        _
      $region31: #{net_forward.1} parent=28 // pred_check_branch
        %915 = sbr.rel (0) target = $region33
      $region32: #{net_forward.1} parent=28 // pred_region
        // Predicated region
        $region34: #{net_forward.1} parent=32 // pred_check
          _
        $region35: #{net_forward.1} parent=32 // pred_check_branch
          %917 = sbr.rel target = $region37
        $region36: #{net_forward.1} parent=32 // pred_region
          // Predicated region
          $region49: #{net_forward.1} parent=36 // pred_check
            _
          $region50: #{net_forward.1} parent=36 // pred_check_branch
            %933 = sbr.rel (0) target = $region52
          $region51: #{net_forward.1} parent=36 // pred_region
            %s935 = ssub.s32 2, 1
            loop: start=0, step=1, limit=1
            $region53: #{net_forward.1} parent=51 // loop_pre_header
              _
            $region54: #{net_forward.1} parent=51 // loop_header
              %s937 = sphi 0, %s941
              %p938 = scmp.ge.s32.totalorder %s937, 1
              %s942 = sphi [#allocation4], [#allocation4]
              %s943 = sphi %s5, %s5
            $region55: #{net_forward.1} parent=51 // loop_header_branch
              %940 = sbr.rel (%p938) target = $region59
            $region56: #{net_forward.1} parent=51 // loop_body
              %v944 = vld [vmem:[%s942] sm:%s935]
              %945 = vst [vmem:[%s943] sm:%s935] %v944
            $region57: #{net_forward.1} parent=51 // loop_footer
              %s941 = sadd.s32 1, %s937
            $region58: #{net_forward.1} parent=51 // loop_footer_branch
              %936 = sbr.rel target = $region54
            $region59: #{net_forward.1} parent=51 // loop_exit
              _
          $region52: #{net_forward.1} parent=36 // pred_fallthru
            _
        $region37: #{net_forward.1} parent=32 // pred_fallthru
          _
        // Predicated region
        $region38: #{net_forward.1} parent=32 // pred_check
          _
        $region39: #{net_forward.1} parent=32 // pred_check_branch
          %919 = sbr.rel (0) target = $region41
        $region40: #{net_forward.1} parent=32 // pred_region
          %s921 = ssub.s32 2, 1
          loop: start=0, step=1, limit=1
          $region42: #{net_forward.1} parent=40 // loop_pre_header
            _
          $region43: #{net_forward.1} parent=40 // loop_header
            %s923 = sphi 0, %s927
            %p924 = scmp.ge.s32.totalorder %s923, 1
            %s928 = sphi [#allocation4], [#allocation4]
            %s929 = sphi %s5, %s5
          $region44: #{net_forward.1} parent=40 // loop_header_branch
            %926 = sbr.rel (%p924) target = $region48
          $region45: #{net_forward.1} parent=40 // loop_body
            %v930 = vld [vmem:[%s928] sm:%s921]
            %931 = vst [vmem:[%s929] sm:%s921] %v930
          $region46: #{net_forward.1} parent=40 // loop_footer
            %s927 = sadd.s32 1, %s923
          $region47: #{net_forward.1} parent=40 // loop_footer_branch
            %922 = sbr.rel target = $region43
          $region48: #{net_forward.1} parent=40 // loop_exit
            _
        $region41: #{net_forward.1} parent=32 // pred_fallthru
          _
      $region33: #{net_forward.1} parent=28 // pred_fallthru
        _
      %946 = vnop
    $region29: #{net_forward.1} parent=1 // pred_fallthru
      _
    // Predicated region
    $region60: #{net_forward.1} parent=1 // pred_check
      _
    $region61: #{net_forward.1} parent=1 // pred_check_branch
      %948 = sbr.rel (0) target = $region63
    $region62: #{net_forward.1} parent=1 // pred_region
      _
    $region63: #{net_forward.1} parent=1 // pred_fallthru
      _
    %949 = vsyncpa [#allocation3], 1

</llo_original>
